<compile_context>
chip_gen: v7x
topology: tpu7x:2x2x1
jax: 0.10.0
libtpu: 0.0.40
codegen_flags: <defaults>
</compile_context>

<pallas_src>
import jax
import jax.numpy as jnp
from jax.experimental import pallas as pl
from jax.experimental.pallas import tpu as pltpu


def _round_up(n, m):
    return ((n + m - 1) // m) * m


def _softplus(z):
    # numerically stable softplus: log(1 + exp(z))
    return jnp.maximum(z, 0.0) + jnp.log1p(jnp.exp(-jnp.abs(z)))


def _block_diag(a, b):
    ra, ca = a.shape
    rb, cb = b.shape
    top = jnp.concatenate([a, jnp.zeros((ra, cb), a.dtype)], axis=1)
    bot = jnp.concatenate([jnp.zeros((rb, ca), b.dtype), b], axis=1)
    return jnp.concatenate([top, bot], axis=0)


# ---------------------------------------------------------------------------
# Kernel (feature-major: batch on the lane axis)
# ---------------------------------------------------------------------------
def al_net_kernel(xT_ref, w1T_ref, wh0T_ref, wh1T_ref, wh2T_ref, bias_ref,
                  outT_ref):
    """Fused AL_Net forward on one batch tile (transposed layout).

    xT_ref   : (S, TB)        f32   input tile, batch on lanes
    w1T_ref  : (H, S)         bf16
    wh0T_ref : (2*H2, H)      bf16
    wh1T_ref : (2*H4, 2*H2)   bf16
    wh2T_ref : (2*A, 2*H4)    bf16
    bias_ref : (W, 4)         f32   per-layer bias columns (zero padded)
    outT_ref : (2*A, TB)            [alpha^T ; beta^T]
    """
    f32 = jnp.float32
    n0 = w1T_ref.shape[0]      # H
    n1 = wh0T_ref.shape[0]     # 2*H2
    n2 = wh1T_ref.shape[0]     # 2*H4
    n3 = wh2T_ref.shape[0]     # 2*act_num

    x = xT_ref[...]                                            # (S, TB) f32

    # fc1 + tanh:  h^T = W1 @ x^T + b1
    h = jnp.dot(w1T_ref[...].astype(f32), x, preferred_element_type=f32)
    h = jnp.tanh(h + bias_ref[:n0, 0:1])

    # fused head layer 0: [wa0^T ; wb0^T] @ h^T
    t = jnp.dot(wh0T_ref[...].astype(f32), h, preferred_element_type=f32)
    t = jnp.tanh(t + bias_ref[:n1, 1:2])

    # fused head layer 1: blockdiag(wa1^T, wb1^T) @ t
    t = jnp.dot(wh1T_ref[...].astype(f32), t, preferred_element_type=f32)
    t = jnp.tanh(t + bias_ref[:n2, 2:3])

    # fused head layer 2 + softplus + 1  (single lane-dense epilogue)
    z = jnp.dot(wh2T_ref[...].astype(f32), t, preferred_element_type=f32)
    z = z + bias_ref[:n3, 3:4]
    outT_ref[...] = (_softplus(z) + 1.0).astype(outT_ref.dtype)


# ---------------------------------------------------------------------------
# Parameter packing (done once, outside the kernel)
# ---------------------------------------------------------------------------
def pack_al_net_params(p):
    """Fuse/pack per-layer params into feature-major kernel operands."""
    w1T = p["w1"].T                                              # (H, S)
    wh0T = jnp.concatenate([p["wa0"].T, p["wb0"].T], axis=0)     # (2*H2, H)
    wh1T = _block_diag(p["wa1"].T, p["wb1"].T)                   # (2*H4, 2*H2)
    wh2T = _block_diag(p["wa2"].T, p["wb2"].T)                   # (2*A, 2*H4)

    def col(*bs):
        return jnp.concatenate([b.reshape(-1) for b in bs])

    cols = [col(p["b1"]),
            col(p["ba0"], p["bb0"]),
            col(p["ba1"], p["bb1"]),
            col(p["ba2"], p["bb2"])]
    width = max(c.shape[0] for c in cols)
    cols = [jnp.pad(c, (0, width - c.shape[0])) for c in cols]
    bias_slab = jnp.stack(cols, axis=1).astype(jnp.float32)      # (width, 4)

    return {
        "w1T": w1T.astype(jnp.bfloat16),
        "wh0T": wh0T.astype(jnp.bfloat16),
        "wh1T": wh1T.astype(jnp.bfloat16),
        "wh2T": wh2T.astype(jnp.bfloat16),
        "bias": bias_slab,
    }


# ---------------------------------------------------------------------------
# Wrapper
# ---------------------------------------------------------------------------
def _choose_batch_tile(B, batch_tile, cap=2048):
    """Batch is the lane axis of every tile -> multiple of 128."""
    bp128 = _round_up(max(B, 1), 128)
    if batch_tile is not None:
        return max(128, min(_round_up(batch_tile, 128), bp128))
    if bp128 <= 256:
        return bp128                      # tiny batch: one tile, no padding blowup
    # Large tiles amortize the ~0.35us/step pipeline overhead; keep >=2 grid
    # steps so the "parallel" axis can be sharded across both v7x TensorCores.
    n_tiles = max(2, pl.cdiv(bp128, cap))
    return _round_up(pl.cdiv(bp128, n_tiles), 128)


def al_net_forward(x, packed, *, batch_tile=None, out_dtype=jnp.float32):
    """x: (B, state_num) f32; packed: pack_al_net_params output -> (alpha, beta)."""
    B, S = x.shape
    n3 = packed["wh2T"].shape[0]          # 2*act_num
    act_num = n3 // 2

    TB = _choose_batch_tile(B, batch_tile)
    Bp = _round_up(B, TB)
    grid = (Bp // TB,)

    # Feature-major input: batch on the lane axis. (No separate cast pass; the
    # kernel reads f32 directly and dequantizes weights on-chip.)
    xT = x.T
    if Bp != B:
        xT = jnp.pad(xT, ((0, 0), (0, Bp - B)))

    operands = (xT, packed["w1T"], packed["wh0T"], packed["wh1T"],
                packed["wh2T"], packed["bias"])

    def _call(single_buffer_weights):
        def resident(arr):
            if single_buffer_weights:
                return pl.BlockSpec(arr.shape, lambda i: (0, 0),
                                    pipeline_mode=pl.Buffered(1))
            return pl.BlockSpec(arr.shape, lambda i: (0, 0))

        return pl.pallas_call(
            al_net_kernel,
            out_shape=jax.ShapeDtypeStruct((n3, Bp), out_dtype),
            grid_spec=pltpu.PrefetchScalarGridSpec(
                num_scalar_prefetch=0,
                grid=grid,
                in_specs=[
                    # batch-tiled input (lane axis = batch)
                    pl.BlockSpec((S, TB), lambda i: (0, i)),
                    # weights / bias slab resident across all batch tiles
                    resident(packed["w1T"]),
                    resident(packed["wh0T"]),
                    resident(packed["wh1T"]),
                    resident(packed["wh2T"]),
                    resident(packed["bias"]),
                ],
                out_specs=pl.BlockSpec((n3, TB), lambda i: (0, i)),
            ),
            compiler_params=pltpu.CompilerParams(
                dimension_semantics=("parallel",),   # megacore sharding on v7x
            ),
        )(*operands)

    try:
        outT = _call(True)
    except Exception:
        # pipeline_mode=pl.Buffered(1) unsupported on this JAX version/backend:
        # fall back to default double buffering (identical results).
        outT = _call(False)

    alpha = outT[:act_num, :B].T
    beta = outT[act_num:, :B].T
    return alpha, beta


# ---------------------------------------------------------------------------
# Init + plain-JAX reference (f32, unfused) for correctness check
# ---------------------------------------------------------------------------
def _orthogonal(key, shape, gain=1.0, dtype=jnp.float32):
    rows, cols = shape
    n = max(rows, cols)
    a = jax.random.normal(key, (n, n), dtype=jnp.float32)
    q, r = jnp.linalg.qr(a)
    q = q * jnp.sign(jnp.diag(r))
    return (gain * q[:rows, :cols]).astype(dtype)


def init_al_net_params(key, state_num, act_num, hidden_layer):
    h, h2, h4 = hidden_layer, hidden_layer // 2, hidden_layer // 4
    keys = jax.random.split(key, 7)
    zeros = lambda n: jnp.zeros((1, n), jnp.float32)
    return {
        "w1": _orthogonal(keys[0], (state_num, h)), "b1": zeros(h),
        "wa0": _orthogonal(keys[1], (h, h2)),  "ba0": zeros(h2),
        "wa1": _orthogonal(keys[2], (h2, h4)), "ba1": zeros(h4),
        "wa2": _orthogonal(keys[3], (h4, act_num)), "ba2": zeros(act_num),
        "wb0": _orthogonal(keys[4], (h, h2)),  "bb0": zeros(h2),
        "wb1": _orthogonal(keys[5], (h2, h4)), "bb1": zeros(h4),
        "wb2": _orthogonal(keys[6], (h4, act_num)), "bb2": zeros(act_num),
    }


def al_net_reference(x, p):
    softplus = lambda z: jnp.maximum(z, 0.0) + jnp.log1p(jnp.exp(-jnp.abs(z)))
    h = jnp.tanh(x @ p["w1"] + p["b1"])
    a = jnp.tanh(h @ p["wa0"] + p["ba0"])
    a = jnp.tanh(a @ p["wa1"] + p["ba1"])
    alpha = softplus(a @ p["wa2"] + p["ba2"]) + 1.0
    b = jnp.tanh(h @ p["wb0"] + p["bb0"])
    b = jnp.tanh(b @ p["wb1"] + p["bb1"])
    beta = softplus(b @ p["wb2"] + p["bb2"]) + 1.0
    return alpha, beta


if __name__ == "__main__":
    # Small shapes consistent with the module's forward:
    #   state_num=16, hidden_layer=32 (-> 16 -> 8), act_num=4, batch=2
    B, state_num, act_num, hidden_layer = 2, 16, 4, 32

    key = jax.random.PRNGKey(0)
    k_x, k_p = jax.random.split(key)
    x = jax.random.normal(k_x, (B, state_num), dtype=jnp.float32)
    params = init_al_net_params(k_p, state_num, act_num, hidden_layer)
    packed = pack_al_net_params(params)

    alpha, beta = al_net_forward(x, packed)
    alpha, beta = jax.block_until_ready(alpha), jax.block_until_ready(beta)

    # sanity check vs plain-JAX f32 reference (bf16 weight storage -> small err)
    alpha_ref, beta_ref = al_net_reference(x, params)
    assert alpha.shape == (B, act_num) and beta.shape == (B, act_num)
    assert jnp.allclose(alpha, alpha_ref, atol=3e-2, rtol=3e-2)
    assert jnp.allclose(beta, beta_ref, atol=3e-2, rtol=3e-2)
    assert bool(jnp.all(alpha > 1.0)) and bool(jnp.all(beta > 1.0))

    print("KERNEL_OK")
</pallas_src>

<mosaic_0001>
module attributes {stable_mosaic.version = 11 : i64} {
  func.func @al_net_kernel(%arg0: i32, %arg1: memref<16x128xf32, #tpu.memory_space<vmem>>, %arg2: memref<32x16xbf16, #tpu.memory_space<vmem>>, %arg3: memref<32x32xbf16, #tpu.memory_space<vmem>>, %arg4: memref<16x32xbf16, #tpu.memory_space<vmem>>, %arg5: memref<8x16xbf16, #tpu.memory_space<vmem>>, %arg6: memref<32x4xf32, #tpu.memory_space<vmem>>, %arg7: memref<8x128xf32, #tpu.memory_space<vmem>>) attributes {dimension_semantics = [#tpu.dimension_semantics<parallel>], iteration_bounds = array<i64: 1>, scalar_prefetch = 0 : i64, scratch_operands = 0 : i64, tpu.core_type = #tpu.core_type<tc>, window_params = [{transform_indices = @transform_0, window_bounds = array<i64: 16, 128>}, {pipeline_mode = #tpu.pipeline_mode<synchronous>, transform_indices = @transform_1, window_bounds = array<i64: 32, 16>}, {pipeline_mode = #tpu.pipeline_mode<synchronous>, transform_indices = @transform_2, window_bounds = array<i64: 32, 32>}, {pipeline_mode = #tpu.pipeline_mode<synchronous>, transform_indices = @transform_3, window_bounds = array<i64: 16, 32>}, {pipeline_mode = #tpu.pipeline_mode<synchronous>, transform_indices = @transform_4, window_bounds = array<i64: 8, 16>}, {pipeline_mode = #tpu.pipeline_mode<synchronous>, transform_indices = @transform_5, window_bounds = array<i64: 32, 4>}, {transform_indices = @transform_6, window_bounds = array<i64: 8, 128>}]} {
    %c0 = arith.constant 0 : index
    %c0_0 = arith.constant 0 : index
    %0 = vector.load %arg1[%c0, %c0_0] : memref<16x128xf32, #tpu.memory_space<vmem>>, vector<16x128xf32>
    %c0_1 = arith.constant 0 : index
    %c0_2 = arith.constant 0 : index
    %1 = vector.load %arg2[%c0_1, %c0_2] : memref<32x16xbf16, #tpu.memory_space<vmem>>, vector<32x16xbf16>
    %2 = arith.extf %1 : vector<32x16xbf16> to vector<32x16xf32>
    %cst = arith.constant dense<0.000000e+00> : vector<32x128xf32>
    %3 = tpu.matmul %2, %0, %cst {dimension_numbers = #tpu.dot_dimension_numbers<[1], [0], [0], [1], [0, 0, 1, 1], [], []>} : vector<32x16xf32>, vector<16x128xf32>, vector<32x128xf32> -> vector<32x128xf32>
    %c0_3 = arith.constant 0 : index
    %c0_4 = arith.constant 0 : index
    %4 = vector.load %arg6[%c0_3, %c0_4] : memref<32x4xf32, #tpu.memory_space<vmem>>, vector<32x1xf32>
    %5 = vector.broadcast %4 : vector<32x1xf32> to vector<32x128xf32>
    %6 = arith.addf %3, %5 : vector<32x128xf32>
    %7 = math.tanh %6 : vector<32x128xf32>
    %c0_5 = arith.constant 0 : index
    %c0_6 = arith.constant 0 : index
    %8 = vector.load %arg3[%c0_5, %c0_6] : memref<32x32xbf16, #tpu.memory_space<vmem>>, vector<32x32xbf16>
    %9 = arith.extf %8 : vector<32x32xbf16> to vector<32x32xf32>
    %cst_7 = arith.constant dense<0.000000e+00> : vector<32x128xf32>
    %10 = tpu.matmul %9, %7, %cst_7 {dimension_numbers = #tpu.dot_dimension_numbers<[1], [0], [0], [1], [0, 0, 1, 1], [], []>} : vector<32x32xf32>, vector<32x128xf32>, vector<32x128xf32> -> vector<32x128xf32>
    %c0_8 = arith.constant 0 : index
    %c1 = arith.constant 1 : index
    %11 = vector.load %arg6[%c0_8, %c1] : memref<32x4xf32, #tpu.memory_space<vmem>>, vector<32x1xf32>
    %12 = vector.broadcast %11 : vector<32x1xf32> to vector<32x128xf32>
    %13 = arith.addf %10, %12 : vector<32x128xf32>
    %14 = math.tanh %13 : vector<32x128xf32>
    %c0_9 = arith.constant 0 : index
    %c0_10 = arith.constant 0 : index
    %15 = vector.load %arg4[%c0_9, %c0_10] : memref<16x32xbf16, #tpu.memory_space<vmem>>, vector<16x32xbf16>
    %16 = arith.extf %15 : vector<16x32xbf16> to vector<16x32xf32>
    %cst_11 = arith.constant dense<0.000000e+00> : vector<16x128xf32>
    %17 = tpu.matmul %16, %14, %cst_11 {dimension_numbers = #tpu.dot_dimension_numbers<[1], [0], [0], [1], [0, 0, 1, 1], [], []>} : vector<16x32xf32>, vector<32x128xf32>, vector<16x128xf32> -> vector<16x128xf32>
    %c0_12 = arith.constant 0 : index
    %c2 = arith.constant 2 : index
    %18 = vector.load %arg6[%c0_12, %c2] : memref<32x4xf32, #tpu.memory_space<vmem>>, vector<16x1xf32>
    %19 = vector.broadcast %18 : vector<16x1xf32> to vector<16x128xf32>
    %20 = arith.addf %17, %19 : vector<16x128xf32>
    %21 = math.tanh %20 : vector<16x128xf32>
    %c0_13 = arith.constant 0 : index
    %c0_14 = arith.constant 0 : index
    %22 = vector.load %arg5[%c0_13, %c0_14] : memref<8x16xbf16, #tpu.memory_space<vmem>>, vector<8x16xbf16>
    %23 = arith.extf %22 : vector<8x16xbf16> to vector<8x16xf32>
    %cst_15 = arith.constant dense<0.000000e+00> : vector<8x128xf32>
    %24 = tpu.matmul %23, %21, %cst_15 {dimension_numbers = #tpu.dot_dimension_numbers<[1], [0], [0], [1], [0, 0, 1, 1], [], []>} : vector<8x16xf32>, vector<16x128xf32>, vector<8x128xf32> -> vector<8x128xf32>
    %c0_16 = arith.constant 0 : index
    %c3 = arith.constant 3 : index
    %25 = vector.load %arg6[%c0_16, %c3] : memref<32x4xf32, #tpu.memory_space<vmem>>, vector<8x1xf32>
    %26 = vector.broadcast %25 : vector<8x1xf32> to vector<8x128xf32>
    %27 = arith.addf %24, %26 : vector<8x128xf32>
    %cst_17 = arith.constant 0.000000e+00 : f32
    %28 = vector.broadcast %cst_17 : f32 to vector<8x128xf32>
    %29 = arith.maximumf %27, %28 : vector<8x128xf32>
    %30 = math.absf %27 : vector<8x128xf32>
    %cst_18 = arith.constant 0.000000e+00 : f32
    %31 = vector.broadcast %cst_18 : f32 to vector<8x128xf32>
    %32 = arith.subf %31, %30 : vector<8x128xf32>
    %33 = math.exp %32 : vector<8x128xf32>
    %34 = math.log1p %33 : vector<8x128xf32>
    %35 = arith.addf %29, %34 : vector<8x128xf32>
    %cst_19 = arith.constant 1.000000e+00 : f32
    %36 = vector.broadcast %cst_19 : f32 to vector<8x128xf32>
    %37 = arith.addf %35, %36 : vector<8x128xf32>
    %c0_20 = arith.constant 0 : index
    %c0_21 = arith.constant 0 : index
    %38 = vector.load %arg7[%c0_20, %c0_21] : memref<8x128xf32, #tpu.memory_space<vmem>>, vector<8x128xf32>
    tpu.vector_store %arg7[%c0_20, %c0_21], %37 {strides = array<i32>} : memref<8x128xf32, #tpu.memory_space<vmem>>, vector<8x128xf32>,
    return
  }
  func.func @transform_0(%arg0: i32) -> (i32, i32) {
    %c0_i32 = arith.constant 0 : i32
    %c0_i32_0 = arith.constant 0 : i32
    return %c0_i32, %arg0 : i32, i32
  }
  func.func @transform_1(%arg0: i32) -> (i32, i32) {
    %c0_i32 = arith.constant 0 : i32
    %c0_i32_0 = arith.constant 0 : i32
    %c0_i32_1 = arith.constant 0 : i32
    return %c0_i32, %c0_i32_0 : i32, i32
  }
  func.func @transform_2(%arg0: i32) -> (i32, i32) {
    %c0_i32 = arith.constant 0 : i32
    %c0_i32_0 = arith.constant 0 : i32
    %c0_i32_1 = arith.constant 0 : i32
    return %c0_i32, %c0_i32_0 : i32, i32
  }
  func.func @transform_3(%arg0: i32) -> (i32, i32) {
    %c0_i32 = arith.constant 0 : i32
    %c0_i32_0 = arith.constant 0 : i32
    %c0_i32_1 = arith.constant 0 : i32
    return %c0_i32, %c0_i32_0 : i32, i32
  }
  func.func @transform_4(%arg0: i32) -> (i32, i32) {
    %c0_i32 = arith.constant 0 : i32
    %c0_i32_0 = arith.constant 0 : i32
    %c0_i32_1 = arith.constant 0 : i32
    return %c0_i32, %c0_i32_0 : i32, i32
  }
  func.func @transform_5(%arg0: i32) -> (i32, i32) {
    %c0_i32 = arith.constant 0 : i32
    %c0_i32_0 = arith.constant 0 : i32
    %c0_i32_1 = arith.constant 0 : i32
    return %c0_i32, %c0_i32_0 : i32, i32
  }
  func.func @transform_6(%arg0: i32) -> (i32, i32) {
    %c0_i32 = arith.constant 0 : i32
    %c0_i32_0 = arith.constant 0 : i32
    return %c0_i32, %arg0 : i32, i32
  }
}

module attributes {stable_mosaic.version = 11 : i64} {
  func.func @al_net_kernel(%arg0: i32, %arg1: memref<16x128xf32, #tpu.memory_space<vmem>>, %arg2: memref<32x16xbf16, #tpu.memory_space<vmem>>, %arg3: memref<32x32xbf16, #tpu.memory_space<vmem>>, %arg4: memref<16x32xbf16, #tpu.memory_space<vmem>>, %arg5: memref<8x16xbf16, #tpu.memory_space<vmem>>, %arg6: memref<32x4xf32, #tpu.memory_space<vmem>>, %arg7: memref<8x128xf32, #tpu.memory_space<vmem>>) attributes {dimension_semantics = [#tpu.dimension_semantics<parallel>], iteration_bounds = array<i64: 1>, scalar_prefetch = 0 : i64, scratch_operands = 0 : i64, tpu.core_type = #tpu.core_type<tc>, window_params = [{transform_indices = @transform_0, window_bounds = array<i64: 16, 128>}, {pipeline_mode = #tpu.pipeline_mode<synchronous>, transform_indices = @transform_1, window_bounds = array<i64: 32, 16>}, {pipeline_mode = #tpu.pipeline_mode<synchronous>, transform_indices = @transform_2, window_bounds = array<i64: 32, 32>}, {pipeline_mode = #tpu.pipeline_mode<synchronous>, transform_indices = @transform_3, window_bounds = array<i64: 16, 32>}, {pipeline_mode = #tpu.pipeline_mode<synchronous>, transform_indices = @transform_4, window_bounds = array<i64: 8, 16>}, {pipeline_mode = #tpu.pipeline_mode<synchronous>, transform_indices = @transform_5, window_bounds = array<i64: 32, 4>}, {transform_indices = @transform_6, window_bounds = array<i64: 8, 128>}]} {
    %c0 = arith.constant 0 : index
    %c0_0 = arith.constant 0 : index
    %0 = vector.load %arg1[%c0, %c0_0] : memref<16x128xf32, #tpu.memory_space<vmem>>, vector<16x128xf32>
    %c0_1 = arith.constant 0 : index
    %c0_2 = arith.constant 0 : index
    %1 = vector.load %arg2[%c0_1, %c0_2] : memref<32x16xbf16, #tpu.memory_space<vmem>>, vector<32x16xbf16>
    %2 = arith.extf %1 : vector<32x16xbf16> to vector<32x16xf32>
    %cst = arith.constant dense<0.000000e+00> : vector<32x128xf32>
    %3 = tpu.matmul %2, %0, %cst {dimension_numbers = #tpu.dot_dimension_numbers<[1], [0], [0], [1], [0, 0, 1, 1], [], []>} : vector<32x16xf32>, vector<16x128xf32>, vector<32x128xf32> -> vector<32x128xf32>
    %c0_3 = arith.constant 0 : index
    %c0_4 = arith.constant 0 : index
    %4 = vector.load %arg6[%c0_3, %c0_4] : memref<32x4xf32, #tpu.memory_space<vmem>>, vector<32x1xf32>
    %5 = vector.broadcast %4 : vector<32x1xf32> to vector<32x128xf32>
    %6 = arith.addf %3, %5 : vector<32x128xf32>
    %7 = math.tanh %6 : vector<32x128xf32>
    %c0_5 = arith.constant 0 : index
    %c0_6 = arith.constant 0 : index
    %8 = vector.load %arg3[%c0_5, %c0_6] : memref<32x32xbf16, #tpu.memory_space<vmem>>, vector<32x32xbf16>
    %9 = arith.extf %8 : vector<32x32xbf16> to vector<32x32xf32>
    %cst_7 = arith.constant dense<0.000000e+00> : vector<32x128xf32>
    %10 = tpu.matmul %9, %7, %cst_7 {dimension_numbers = #tpu.dot_dimension_numbers<[1], [0], [0], [1], [0, 0, 1, 1], [], []>} : vector<32x32xf32>, vector<32x128xf32>, vector<32x128xf32> -> vector<32x128xf32>
    %c0_8 = arith.constant 0 : index
    %c1 = arith.constant 1 : index
    %11 = vector.load %arg6[%c0_8, %c1] : memref<32x4xf32, #tpu.memory_space<vmem>>, vector<32x1xf32>
    %12 = vector.broadcast %11 : vector<32x1xf32> to vector<32x128xf32>
    %13 = arith.addf %10, %12 : vector<32x128xf32>
    %14 = math.tanh %13 : vector<32x128xf32>
    %c0_9 = arith.constant 0 : index
    %c0_10 = arith.constant 0 : index
    %15 = vector.load %arg4[%c0_9, %c0_10] : memref<16x32xbf16, #tpu.memory_space<vmem>>, vector<16x32xbf16>
    %16 = arith.extf %15 : vector<16x32xbf16> to vector<16x32xf32>
    %cst_11 = arith.constant dense<0.000000e+00> : vector<16x128xf32>
    %17 = tpu.matmul %16, %14, %cst_11 {dimension_numbers = #tpu.dot_dimension_numbers<[1], [0], [0], [1], [0, 0, 1, 1], [], []>} : vector<16x32xf32>, vector<32x128xf32>, vector<16x128xf32> -> vector<16x128xf32>
    %c0_12 = arith.constant 0 : index
    %c2 = arith.constant 2 : index
    %18 = vector.load %arg6[%c0_12, %c2] : memref<32x4xf32, #tpu.memory_space<vmem>>, vector<16x1xf32>
    %19 = vector.broadcast %18 : vector<16x1xf32> to vector<16x128xf32>
    %20 = arith.addf %17, %19 : vector<16x128xf32>
    %21 = math.tanh %20 : vector<16x128xf32>
    %c0_13 = arith.constant 0 : index
    %c0_14 = arith.constant 0 : index
    %22 = vector.load %arg5[%c0_13, %c0_14] : memref<8x16xbf16, #tpu.memory_space<vmem>>, vector<8x16xbf16>
    %23 = arith.extf %22 : vector<8x16xbf16> to vector<8x16xf32>
    %cst_15 = arith.constant dense<0.000000e+00> : vector<8x128xf32>
    %24 = tpu.matmul %23, %21, %cst_15 {dimension_numbers = #tpu.dot_dimension_numbers<[1], [0], [0], [1], [0, 0, 1, 1], [], []>} : vector<8x16xf32>, vector<16x128xf32>, vector<8x128xf32> -> vector<8x128xf32>
    %c0_16 = arith.constant 0 : index
    %c3 = arith.constant 3 : index
    %25 = vector.load %arg6[%c0_16, %c3] : memref<32x4xf32, #tpu.memory_space<vmem>>, vector<8x1xf32>
    %26 = vector.broadcast %25 : vector<8x1xf32> to vector<8x128xf32>
    %27 = arith.addf %24, %26 : vector<8x128xf32>
    %cst_17 = arith.constant 0.000000e+00 : f32
    %28 = vector.broadcast %cst_17 : f32 to vector<8x128xf32>
    %29 = arith.maximumf %27, %28 : vector<8x128xf32>
    %30 = math.absf %27 : vector<8x128xf32>
    %cst_18 = arith.constant 0.000000e+00 : f32
    %31 = vector.broadcast %cst_18 : f32 to vector<8x128xf32>
    %32 = arith.subf %31, %30 : vector<8x128xf32>
    %33 = math.exp %32 : vector<8x128xf32>
    %34 = math.log1p %33 : vector<8x128xf32>
    %35 = arith.addf %29, %34 : vector<8x128xf32>
    %cst_19 = arith.constant 1.000000e+00 : f32
    %36 = vector.broadcast %cst_19 : f32 to vector<8x128xf32>
    %37 = arith.addf %35, %36 : vector<8x128xf32>
    %c0_20 = arith.constant 0 : index
    %c0_21 = arith.constant 0 : index
    %38 = vector.load %arg7[%c0_20, %c0_21] : memref<8x128xf32, #tpu.memory_space<vmem>>, vector<8x128xf32>
    tpu.vector_store %arg7[%c0_20, %c0_21], %37 {strides = array<i32>} : memref<8x128xf32, #tpu.memory_space<vmem>>, vector<8x128xf32>,
    return
  }
  func.func @transform_0(%arg0: i32) -> (i32, i32) {
    %c0_i32 = arith.constant 0 : i32
    %c0_i32_0 = arith.constant 0 : i32
    return %c0_i32, %arg0 : i32, i32
  }
  func.func @transform_1(%arg0: i32) -> (i32, i32) {
    %c0_i32 = arith.constant 0 : i32
    %c0_i32_0 = arith.constant 0 : i32
    %c0_i32_1 = arith.constant 0 : i32
    return %c0_i32, %c0_i32_0 : i32, i32
  }
  func.func @transform_2(%arg0: i32) -> (i32, i32) {
    %c0_i32 = arith.constant 0 : i32
    %c0_i32_0 = arith.constant 0 : i32
    %c0_i32_1 = arith.constant 0 : i32
    return %c0_i32, %c0_i32_0 : i32, i32
  }
  func.func @transform_3(%arg0: i32) -> (i32, i32) {
    %c0_i32 = arith.constant 0 : i32
    %c0_i32_0 = arith.constant 0 : i32
    %c0_i32_1 = arith.constant 0 : i32
    return %c0_i32, %c0_i32_0 : i32, i32
  }
  func.func @transform_4(%arg0: i32) -> (i32, i32) {
    %c0_i32 = arith.constant 0 : i32
    %c0_i32_0 = arith.constant 0 : i32
    %c0_i32_1 = arith.constant 0 : i32
    return %c0_i32, %c0_i32_0 : i32, i32
  }
  func.func @transform_5(%arg0: i32) -> (i32, i32) {
    %c0_i32 = arith.constant 0 : i32
    %c0_i32_0 = arith.constant 0 : i32
    %c0_i32_1 = arith.constant 0 : i32
    return %c0_i32, %c0_i32_0 : i32, i32
  }
  func.func @transform_6(%arg0: i32) -> (i32, i32) {
    %c0_i32 = arith.constant 0 : i32
    %c0_i32_0 = arith.constant 0 : i32
    return %c0_i32, %arg0 : i32, i32
  }
}

</mosaic_0001>

<llo_original>
// kernel: tpu_custom_call.1
$region0: #{tpu_custom_call.1}
  #allocation0 [shape = 'u32[]', space=smem, size = 0x4, offset = 0x4, fixed_abs, tag = 'smem constant byte address 0x4 - core index']
  #allocation1 [shape = 'u32[144,128]{1,0:T(1,128)}', space=vmem, size = 0x12000, scoped, tag = 'internal scratch']
  %s0 = inlined_call_operand.vmem [shape: f32[16,128], index: 0, kind: input, shape index: {}]
  %s1 = inlined_call_operand.vmem [shape: bf16[32,16], index: 1, kind: input, shape index: {}]
  %s2 = inlined_call_operand.vmem [shape: bf16[32,32], index: 2, kind: input, shape index: {}]
  %s3 = inlined_call_operand.vmem [shape: bf16[16,32], index: 3, kind: input, shape index: {}]
  %s4 = inlined_call_operand.vmem [shape: bf16[8,16], index: 4, kind: input, shape index: {}]
  %s5 = inlined_call_operand.vmem [shape: f32[32,4], index: 5, kind: input, shape index: {}]
  %s6 = inlined_call_operand.hbm [shape: f32[8,128], index: 6, kind: output, shape index: {}]
  %s7 = sld [smem:[#allocation0]]
  $region34: #{tpu_custom_call.1} parent=0
    _
  %s9 = ssub.s32 1, %s7
  %s10 = scalar_select 0, %s9, %s7
  $region1: #{tpu_custom_call.1} parent=0
    #allocation2 [shape = 'u8[4096]{0}', space=vmem, size = 0x1000, scoped, tag = 'output window, operand 0, single buffered']
    #allocation3 [shape = 's32[1]{0}', space=sflag, size = 0x4, scoped, tag = 'scoped memory for tpu_custom_call.1']
    %11 = vsyncpa [#allocation3], 0
    // Predicated region
    $region2: #{tpu_custom_call.1} parent=1 // pred_check
      _
    $region3: #{tpu_custom_call.1} parent=1 // pred_check_branch
      %13 = sbr.rel (0) target = $region5
    $region4: #{tpu_custom_call.1} parent=1 // pred_region
      _
    $region5: #{tpu_custom_call.1} parent=1 // pred_fallthru
      _
    // Predicated region
    $region6: #{tpu_custom_call.1} parent=1 // pred_check
      _
    $region7: #{tpu_custom_call.1} parent=1 // pred_check_branch
      %15 = sbr.rel (0) target = $region9
    $region8: #{tpu_custom_call.1} parent=1 // pred_region
      _
    $region9: #{tpu_custom_call.1} parent=1 // pred_fallthru
      _
    // Predicated region
    $region10: #{tpu_custom_call.1} parent=1 // pred_check
      _
    $region11: #{tpu_custom_call.1} parent=1 // pred_check_branch
      %17 = sbr.rel (0) target = $region13
    $region12: #{tpu_custom_call.1} parent=1 // pred_region
      _
    $region13: #{tpu_custom_call.1} parent=1 // pred_fallthru
      _
    // Predicated region
    $region14: #{tpu_custom_call.1} parent=1 // pred_check
      _
    $region15: #{tpu_custom_call.1} parent=1 // pred_check_branch
      %19 = sbr.rel (0) target = $region17
    $region16: #{tpu_custom_call.1} parent=1 // pred_region
      _
    $region17: #{tpu_custom_call.1} parent=1 // pred_fallthru
      _
    // Predicated region
    $region18: #{tpu_custom_call.1} parent=1 // pred_check
      _
    $region19: #{tpu_custom_call.1} parent=1 // pred_check_branch
      %21 = sbr.rel (0) target = $region21
    $region20: #{tpu_custom_call.1} parent=1 // pred_region
      _
    $region21: #{tpu_custom_call.1} parent=1 // pred_fallthru
      _
    // Predicated region
    $region22: #{tpu_custom_call.1} parent=1 // pred_check
      _
    $region23: #{tpu_custom_call.1} parent=1 // pred_check_branch
      %23 = sbr.rel (0) target = $region25
    $region24: #{tpu_custom_call.1} parent=1 // pred_region
      _
    $region25: #{tpu_custom_call.1} parent=1 // pred_fallthru
      _
    %v24 = vld [vmem:[%s0] sm:$0xff]
    %v25 = vld [vmem:[%s0 + $0x8] sm:$0xff]
    %v26 = vld [vmem:[%s1] sm:$0xf]
    %v27 = vld [vmem:[%s1 + $0x4] sm:$0xf]
    %v28 = vld [vmem:[%s1 + $0x8] sm:$0xf]
    %v29 = vld [vmem:[%s1 + $0xc] sm:$0xf]
    %v30 = vunpack.c.l.bf16 %v26
    %v31 = vunpack.c.l.bf16 %v27
    %v32 = vunpack.c.l.bf16 %v28
    %v33 = vunpack.c.l.bf16 %v29
    %v34 = vld [vmem:[%s5] sm:$0xff]
    %v35 = vld [vmem:[%s5 + $0x8] sm:$0xff]
    %v36 = vld [vmem:[%s5 + $0x10] sm:$0xff]
    %v37 = vld [vmem:[%s5 + $0x18] sm:$0xff]
    %39 = vset.pattern.permute.xlu0 0
    %40 = vperm.xlu0 %39, %v34
    %v41 = vpop.permute.xlu0 %40
    %44 = vset.pattern.permute.xlu0 0
    %45 = vperm.xlu0 %44, %v35
    %v46 = vpop.permute.xlu0 %45
    %49 = vset.pattern.permute.xlu0 0
    %50 = vperm.xlu0 %49, %v36
    %v51 = vpop.permute.xlu0 %50
    %54 = vset.pattern.permute.xlu0 0
    %55 = vperm.xlu0 %54, %v37
    %v56 = vpop.permute.xlu0 %55
    %vm58 = vcmask 130048
    %v60 = vsel %vm58, %v30, 0
    %v63 = vsel %vm58, %v31, 0
    %v66 = vsel %vm58, %v32, 0
    %v69 = vsel %vm58, %v33, 0
    %71 = vmatprep.subr.mxu0 0.0
    %72 = vmatpush1.msra.mxu0 %v24
    %73 = vmatprep.subr.mxu0 0.0
    %74 = vmatpush1.msra.mxu0 %v25
    %75 = vmatprep.subr.mxu0 0.0
    %76 = vmatpush1.msra.mxu0 0.0
    %77 = vmatprep.subr.mxu0 0.0
    %78 = vmatpush1.msra.mxu0 0.0
    %79 = vmatprep.subr.mxu0 0.0
    %80 = vmatpush1.msra.mxu0 0.0
    %81 = vmatprep.subr.mxu0 0.0
    %82 = vmatpush1.msra.mxu0 0.0
    %83 = vmatprep.subr.mxu0 0.0
    %84 = vmatpush1.msra.mxu0 0.0
    %85 = vmatprep.subr.mxu0 0.0
    %86 = vmatpush1.msra.mxu0 0.0
    %87 = vmatprep.subr.mxu0 0.0
    %88 = vmatpush1.msra.mxu0 0.0
    %89 = vmatprep.subr.mxu0 0.0
    %90 = vmatpush1.msra.mxu0 0.0
    %91 = vmatprep.subr.mxu0 0.0
    %92 = vmatpush1.msra.mxu0 0.0
    %93 = vmatprep.subr.mxu0 0.0
    %94 = vmatpush1.msra.mxu0 0.0
    %95 = vmatprep.subr.mxu0 0.0
    %96 = vmatpush1.msra.mxu0 0.0
    %97 = vmatprep.subr.mxu0 0.0
    %98 = vmatpush1.msra.mxu0 0.0
    %99 = vmatprep.subr.mxu0 0.0
    %100 = vmatpush1.msra.mxu0 0.0
    %101 = vmatprep.subr.mxu0 0.0
    %102 = vmatpush1.msra.mxu0 0.0
    %103 = vmatprep.subr.mxu0 0.0
    %104 = vmatpush1.msra.mxu0 0.0
    %105 = vmatprep.subr.mxu0 0.0
    %106 = vmatpush1.msra.mxu0 0.0
    %107 = vmatprep.subr.mxu0 0.0
    %108 = vmatpush1.msra.mxu0 0.0
    %109 = vmatprep.subr.mxu0 0.0
    %110 = vmatpush1.msra.mxu0 0.0
    %111 = vmatprep.subr.mxu0 0.0
    %112 = vmatpush1.msra.mxu0 0.0
    %113 = vmatprep.subr.mxu0 0.0
    %114 = vmatpush1.msra.mxu0 0.0
    %115 = vmatprep.subr.mxu0 0.0
    %116 = vmatpush1.msra.mxu0 0.0
    %117 = vmatprep.subr.mxu0 0.0
    %118 = vmatpush1.msra.mxu0 0.0
    %119 = vmatprep.subr.mxu0 0.0
    %120 = vmatpush1.msra.mxu0 0.0
    %121 = vmatprep.subr.mxu0 0.0
    %122 = vmatpush1.msra.mxu0 0.0
    %123 = vmatprep.subr.mxu0 0.0
    %124 = vmatpush1.msra.mxu0 0.0
    %125 = vmatprep.subr.mxu0 0.0
    %126 = vmatpush1.msra.mxu0 0.0
    %127 = vmatprep.subr.mxu0 0.0
    %128 = vmatpush1.msra.mxu0 0.0
    %129 = vmatprep.subr.mxu0 0.0
    %130 = vmatpush1.msra.mxu0 0.0
    %131 = vmatprep.subr.mxu0 0.0
    %132 = vmatpush1.msra.mxu0 0.0
    %133 = vmatprep.subr.mxu0 0.0
    %134 = vmatpush1.msra.mxu0 0.0
    %135 = vmatprep.mubr.f32.mxu0 0.0
    %136 = vmatmul.mubr.f32.gmra.mrb[0].mxu0 %v60
    %v137 = vpop.f32.mrb[0].mxu0
    %v138 = vadd.f32 %v41, %v137
    %v139 = vpop.f32.mrb[0].mxu0
    %140 = vmatprep.mubr.f32.mxu0 0.0
    %141 = vmatmul.mubr.f32.gmra.mrb[0].mxu0 %v63
    %v142 = vpop.f32.mrb[0].mxu0
    %v143 = vadd.f32 %v46, %v142
    %v144 = vpop.f32.mrb[0].mxu0
    %145 = vmatprep.mubr.f32.mxu0 0.0
    %146 = vmatmul.mubr.f32.gmra.mrb[0].mxu0 %v66
    %v147 = vpop.f32.mrb[0].mxu0
    %v148 = vadd.f32 %v51, %v147
    %v149 = vpop.f32.mrb[0].mxu0
    %150 = vmatprep.mubr.f32.mxu0 0.0
    %151 = vmatmul.mubr.f32.gmra.mrb[0].mxu0 %v69
    %v152 = vpop.f32.mrb[0].mxu0
    %v153 = vadd.f32 %v56, %v152
    %v154 = vpop.f32.mrb[0].mxu0
    %155 = vdwg.mxu0
    %v156 = vtanh.pop %v138
    %v157 = vtanh.pop %v143
    %v158 = vtanh.pop %v148
    %v159 = vtanh.pop %v153
    %v160 = vld [vmem:[%s2] sm:$0xf]
    %v161 = vld [vmem:[%s2 + $0x4] sm:$0xf]
    %v162 = vld [vmem:[%s2 + $0x8] sm:$0xf]
    %v163 = vld [vmem:[%s2 + $0xc] sm:$0xf]
    %v164 = vunpack.c.l.bf16 %v160
    %v165 = vunpack.c.l.bf16 %v161
    %v166 = vunpack.c.l.bf16 %v162
    %v167 = vunpack.c.l.bf16 %v163
    %168 = vset.pattern.permute.xlu0 1
    %169 = vperm.xlu0 %168, %v34
    %v170 = vpop.permute.xlu0 %169
    %172 = vset.pattern.permute.xlu0 1
    %173 = vperm.xlu0 %172, %v35
    %v174 = vpop.permute.xlu0 %173
    %176 = vset.pattern.permute.xlu0 1
    %177 = vperm.xlu0 %176, %v36
    %v178 = vpop.permute.xlu0 %177
    %180 = vset.pattern.permute.xlu0 1
    %181 = vperm.xlu0 %180, %v37
    %v182 = vpop.permute.xlu0 %181
    %vm184 = vcmask 261120
    %v186 = vsel %vm184, %v164, 0
    %v189 = vsel %vm184, %v165, 0
    %v192 = vsel %vm184, %v166, 0
    %v195 = vsel %vm184, %v167, 0
    %197 = vmatprep.subr.mxu0 0.0
    %198 = vmatpush1.msra.mxu0 %v156
    %199 = vmatprep.subr.mxu0 0.0
    %200 = vmatpush1.msra.mxu0 %v157
    %201 = vmatprep.subr.mxu0 0.0
    %202 = vmatpush1.msra.mxu0 %v158
    %203 = vmatprep.subr.mxu0 0.0
    %204 = vmatpush1.msra.mxu0 %v159
    %205 = vmatprep.subr.mxu0 0.0
    %206 = vmatpush1.msra.mxu0 0.0
    %207 = vmatprep.subr.mxu0 0.0
    %208 = vmatpush1.msra.mxu0 0.0
    %209 = vmatprep.subr.mxu0 0.0
    %210 = vmatpush1.msra.mxu0 0.0
    %211 = vmatprep.subr.mxu0 0.0
    %212 = vmatpush1.msra.mxu0 0.0
    %213 = vmatprep.subr.mxu0 0.0
    %214 = vmatpush1.msra.mxu0 0.0
    %215 = vmatprep.subr.mxu0 0.0
    %216 = vmatpush1.msra.mxu0 0.0
    %217 = vmatprep.subr.mxu0 0.0
    %218 = vmatpush1.msra.mxu0 0.0
    %219 = vmatprep.subr.mxu0 0.0
    %220 = vmatpush1.msra.mxu0 0.0
    %221 = vmatprep.subr.mxu0 0.0
    %222 = vmatpush1.msra.mxu0 0.0
    %223 = vmatprep.subr.mxu0 0.0
    %224 = vmatpush1.msra.mxu0 0.0
    %225 = vmatprep.subr.mxu0 0.0
    %226 = vmatpush1.msra.mxu0 0.0
    %227 = vmatprep.subr.mxu0 0.0
    %228 = vmatpush1.msra.mxu0 0.0
    %229 = vmatprep.subr.mxu0 0.0
    %230 = vmatpush1.msra.mxu0 0.0
    %231 = vmatprep.subr.mxu0 0.0
    %232 = vmatpush1.msra.mxu0 0.0
    %233 = vmatprep.subr.mxu0 0.0
    %234 = vmatpush1.msra.mxu0 0.0
    %235 = vmatprep.subr.mxu0 0.0
    %236 = vmatpush1.msra.mxu0 0.0
    %237 = vmatprep.subr.mxu0 0.0
    %238 = vmatpush1.msra.mxu0 0.0
    %239 = vmatprep.subr.mxu0 0.0
    %240 = vmatpush1.msra.mxu0 0.0
    %241 = vmatprep.subr.mxu0 0.0
    %242 = vmatpush1.msra.mxu0 0.0
    %243 = vmatprep.subr.mxu0 0.0
    %244 = vmatpush1.msra.mxu0 0.0
    %245 = vmatprep.subr.mxu0 0.0
    %246 = vmatpush1.msra.mxu0 0.0
    %247 = vmatprep.subr.mxu0 0.0
    %248 = vmatpush1.msra.mxu0 0.0
    %249 = vmatprep.subr.mxu0 0.0
    %250 = vmatpush1.msra.mxu0 0.0
    %251 = vmatprep.subr.mxu0 0.0
    %252 = vmatpush1.msra.mxu0 0.0
    %253 = vmatprep.subr.mxu0 0.0
    %254 = vmatpush1.msra.mxu0 0.0
    %255 = vmatprep.subr.mxu0 0.0
    %256 = vmatpush1.msra.mxu0 0.0
    %257 = vmatprep.subr.mxu0 0.0
    %258 = vmatpush1.msra.mxu0 0.0
    %259 = vmatprep.subr.mxu0 0.0
    %260 = vmatpush1.msra.mxu0 0.0
    %261 = vmatprep.mubr.f32.mxu0 0.0
    %262 = vmatmul.mubr.f32.gmra.mrb[0].mxu0 %v186
    %v263 = vpop.f32.mrb[0].mxu0
    %v264 = vadd.f32 %v170, %v263
    %v265 = vpop.f32.mrb[0].mxu0
    %266 = vmatprep.mubr.f32.mxu0 0.0
    %267 = vmatmul.mubr.f32.gmra.mrb[0].mxu0 %v189
    %v268 = vpop.f32.mrb[0].mxu0
    %v269 = vadd.f32 %v174, %v268
    %v270 = vpop.f32.mrb[0].mxu0
    %271 = vmatprep.mubr.f32.mxu0 0.0
    %272 = vmatmul.mubr.f32.gmra.mrb[0].mxu0 %v192
    %v273 = vpop.f32.mrb[0].mxu0
    %v274 = vadd.f32 %v178, %v273
    %v275 = vpop.f32.mrb[0].mxu0
    %276 = vmatprep.mubr.f32.mxu0 0.0
    %277 = vmatmul.mubr.f32.gmra.mrb[0].mxu0 %v195
    %v278 = vpop.f32.mrb[0].mxu0
    %v279 = vadd.f32 %v182, %v278
    %v280 = vpop.f32.mrb[0].mxu0
    %281 = vdwg.mxu0
    %v282 = vtanh.pop %v264
    %v283 = vtanh.pop %v269
    %v284 = vtanh.pop %v274
    %v285 = vtanh.pop %v279
    %v286 = vld [vmem:[%s3] sm:$0xf]
    %v287 = vld [vmem:[%s3 + $0x4] sm:$0xf]
    %v288 = vunpack.c.l.bf16 %v286
    %v289 = vunpack.c.l.bf16 %v287
    %v290 = vld [vmem:[%s5] sm:$0xff]
    %v291 = vld [vmem:[%s5 + $0x8] sm:$0xff]
    %293 = vset.pattern.permute.xlu0 2
    %294 = vperm.xlu0 %293, %v290
    %v295 = vpop.permute.xlu0 %294
    %298 = vset.pattern.permute.xlu0 2
    %299 = vperm.xlu0 %298, %v291
    %v300 = vpop.permute.xlu0 %299
    %v303 = vsel %vm184, %v288, 0
    %v306 = vsel %vm184, %v289, 0
    %308 = vmatprep.subr.mxu0 0.0
    %309 = vmatpush1.msra.mxu0 %v282
    %310 = vmatprep.subr.mxu0 0.0
    %311 = vmatpush1.msra.mxu0 %v283
    %312 = vmatprep.subr.mxu0 0.0
    %313 = vmatpush1.msra.mxu0 %v284
    %314 = vmatprep.subr.mxu0 0.0
    %315 = vmatpush1.msra.mxu0 %v285
    %316 = vmatprep.subr.mxu0 0.0
    %317 = vmatpush1.msra.mxu0 0.0
    %318 = vmatprep.subr.mxu0 0.0
    %319 = vmatpush1.msra.mxu0 0.0
    %320 = vmatprep.subr.mxu0 0.0
    %321 = vmatpush1.msra.mxu0 0.0
    %322 = vmatprep.subr.mxu0 0.0
    %323 = vmatpush1.msra.mxu0 0.0
    %324 = vmatprep.subr.mxu0 0.0
    %325 = vmatpush1.msra.mxu0 0.0
    %326 = vmatprep.subr.mxu0 0.0
    %327 = vmatpush1.msra.mxu0 0.0
    %328 = vmatprep.subr.mxu0 0.0
    %329 = vmatpush1.msra.mxu0 0.0
    %330 = vmatprep.subr.mxu0 0.0
    %331 = vmatpush1.msra.mxu0 0.0
    %332 = vmatprep.subr.mxu0 0.0
    %333 = vmatpush1.msra.mxu0 0.0
    %334 = vmatprep.subr.mxu0 0.0
    %335 = vmatpush1.msra.mxu0 0.0
    %336 = vmatprep.subr.mxu0 0.0
    %337 = vmatpush1.msra.mxu0 0.0
    %338 = vmatprep.subr.mxu0 0.0
    %339 = vmatpush1.msra.mxu0 0.0
    %340 = vmatprep.subr.mxu0 0.0
    %341 = vmatpush1.msra.mxu0 0.0
    %342 = vmatprep.subr.mxu0 0.0
    %343 = vmatpush1.msra.mxu0 0.0
    %344 = vmatprep.subr.mxu0 0.0
    %345 = vmatpush1.msra.mxu0 0.0
    %346 = vmatprep.subr.mxu0 0.0
    %347 = vmatpush1.msra.mxu0 0.0
    %348 = vmatprep.subr.mxu0 0.0
    %349 = vmatpush1.msra.mxu0 0.0
    %350 = vmatprep.subr.mxu0 0.0
    %351 = vmatpush1.msra.mxu0 0.0
    %352 = vmatprep.subr.mxu0 0.0
    %353 = vmatpush1.msra.mxu0 0.0
    %354 = vmatprep.subr.mxu0 0.0
    %355 = vmatpush1.msra.mxu0 0.0
    %356 = vmatprep.subr.mxu0 0.0
    %357 = vmatpush1.msra.mxu0 0.0
    %358 = vmatprep.subr.mxu0 0.0
    %359 = vmatpush1.msra.mxu0 0.0
    %360 = vmatprep.subr.mxu0 0.0
    %361 = vmatpush1.msra.mxu0 0.0
    %362 = vmatprep.subr.mxu0 0.0
    %363 = vmatpush1.msra.mxu0 0.0
    %364 = vmatprep.subr.mxu0 0.0
    %365 = vmatpush1.msra.mxu0 0.0
    %366 = vmatprep.subr.mxu0 0.0
    %367 = vmatpush1.msra.mxu0 0.0
    %368 = vmatprep.subr.mxu0 0.0
    %369 = vmatpush1.msra.mxu0 0.0
    %370 = vmatprep.subr.mxu0 0.0
    %371 = vmatpush1.msra.mxu0 0.0
    %372 = vmatprep.mubr.f32.mxu0 0.0
    %373 = vmatmul.mubr.f32.gmra.mrb[0].mxu0 %v303
    %v374 = vpop.f32.mrb[0].mxu0
    %v375 = vadd.f32 %v295, %v374
    %v376 = vpop.f32.mrb[0].mxu0
    %377 = vmatprep.mubr.f32.mxu0 0.0
    %378 = vmatmul.mubr.f32.gmra.mrb[0].mxu0 %v306
    %v379 = vpop.f32.mrb[0].mxu0
    %v380 = vadd.f32 %v300, %v379
    %v381 = vpop.f32.mrb[0].mxu0
    %382 = vdwg.mxu0
    %v383 = vtanh.pop %v375
    %v384 = vtanh.pop %v380
    %v385 = vld [vmem:[%s4] sm:$0xf]
    %v386 = vunpack.c.l.bf16 %v385
    %v387 = vld [vmem:[%s5] sm:$0xff]
    %389 = vset.pattern.permute.xlu0 3
    %390 = vperm.xlu0 %389, %v387
    %v391 = vpop.permute.xlu0 %390
    %v394 = vsel %vm58, %v386, 0
    %396 = vmatprep.subr.mxu0 0.0
    %397 = vmatpush1.msra.mxu0 %v383
    %398 = vmatprep.subr.mxu0 0.0
    %399 = vmatpush1.msra.mxu0 %v384
    %400 = vmatprep.subr.mxu0 0.0
    %401 = vmatpush1.msra.mxu0 0.0
    %402 = vmatprep.subr.mxu0 0.0
    %403 = vmatpush1.msra.mxu0 0.0
    %404 = vmatprep.subr.mxu0 0.0
    %405 = vmatpush1.msra.mxu0 0.0
    %406 = vmatprep.subr.mxu0 0.0
    %407 = vmatpush1.msra.mxu0 0.0
    %408 = vmatprep.subr.mxu0 0.0
    %409 = vmatpush1.msra.mxu0 0.0
    %410 = vmatprep.subr.mxu0 0.0
    %411 = vmatpush1.msra.mxu0 0.0
    %412 = vmatprep.subr.mxu0 0.0
    %413 = vmatpush1.msra.mxu0 0.0
    %414 = vmatprep.subr.mxu0 0.0
    %415 = vmatpush1.msra.mxu0 0.0
    %416 = vmatprep.subr.mxu0 0.0
    %417 = vmatpush1.msra.mxu0 0.0
    %418 = vmatprep.subr.mxu0 0.0
    %419 = vmatpush1.msra.mxu0 0.0
    %420 = vmatprep.subr.mxu0 0.0
    %421 = vmatpush1.msra.mxu0 0.0
    %422 = vmatprep.subr.mxu0 0.0
    %423 = vmatpush1.msra.mxu0 0.0
    %424 = vmatprep.subr.mxu0 0.0
    %425 = vmatpush1.msra.mxu0 0.0
    %426 = vmatprep.subr.mxu0 0.0
    %427 = vmatpush1.msra.mxu0 0.0
    %428 = vmatprep.subr.mxu0 0.0
    %429 = vmatpush1.msra.mxu0 0.0
    %430 = vmatprep.subr.mxu0 0.0
    %431 = vmatpush1.msra.mxu0 0.0
    %432 = vmatprep.subr.mxu0 0.0
    %433 = vmatpush1.msra.mxu0 0.0
    %434 = vmatprep.subr.mxu0 0.0
    %435 = vmatpush1.msra.mxu0 0.0
    %436 = vmatprep.subr.mxu0 0.0
    %437 = vmatpush1.msra.mxu0 0.0
    %438 = vmatprep.subr.mxu0 0.0
    %439 = vmatpush1.msra.mxu0 0.0
    %440 = vmatprep.subr.mxu0 0.0
    %441 = vmatpush1.msra.mxu0 0.0
    %442 = vmatprep.subr.mxu0 0.0
    %443 = vmatpush1.msra.mxu0 0.0
    %444 = vmatprep.subr.mxu0 0.0
    %445 = vmatpush1.msra.mxu0 0.0
    %446 = vmatprep.subr.mxu0 0.0
    %447 = vmatpush1.msra.mxu0 0.0
    %448 = vmatprep.subr.mxu0 0.0
    %449 = vmatpush1.msra.mxu0 0.0
    %450 = vmatprep.subr.mxu0 0.0
    %451 = vmatpush1.msra.mxu0 0.0
    %452 = vmatprep.subr.mxu0 0.0
    %453 = vmatpush1.msra.mxu0 0.0
    %454 = vmatprep.subr.mxu0 0.0
    %455 = vmatpush1.msra.mxu0 0.0
    %456 = vmatprep.subr.mxu0 0.0
    %457 = vmatpush1.msra.mxu0 0.0
    %458 = vmatprep.subr.mxu0 0.0
    %459 = vmatpush1.msra.mxu0 0.0
    %460 = vmatprep.mubr.f32.mxu0 0.0
    %461 = vmatmul.mubr.f32.gmra.mrb[0].mxu0 %v394
    %v462 = vpop.f32.mrb[0].mxu0
    %v463 = vadd.f32 %v391, %v462
    %v464 = vpop.f32.mrb[0].mxu0
    %465 = vdwg.mxu0
    %v466 = vmax.f32 %v463, 0.0
    %v467 = vand.u32 2147483647, %v463
    %v468 = vsub.f32 0.0, %v467
    %v469 = vmul.f32 %v468, 1.442695
    %v470 = vpow.pop %v469
    %v471 = vadd.f32 %v470, 1.0
    %v472 = vlog2.pop %v471
    %v473 = vmul.f32 %v472, 0.6931472
    %v474 = vmul.f32 -0.5, %v470
    %v475 = vadd.f32 %v474, 1.0
    %v476 = vmul.f32 %v475, %v470
    %v477 = vand.u32 2147483647, %v470
    %vm478 = vcmp.lt.f32.partialorder %v477, 0.0004427343
    %v479 = vsel %vm478, %v476, %v473
    %v480 = vadd.f32 %v466, %v479
    %v481 = vadd.f32 %v480, 1.0
    %482 = vst [vmem:[#allocation2] sm:$0xff] %v481
    // Predicated region
    $region26: #{tpu_custom_call.1} parent=1 // pred_check
      _
    $region27: #{tpu_custom_call.1} parent=1 // pred_check_branch
      %484 = sbr.rel (0) target = $region29
    $region28: #{tpu_custom_call.1} parent=1 // pred_region
      %s486 = ssub.s32 128, 128
      %487 = vsyncadd [#allocation3], %s486
      %s489 = sshll.u32 [#allocation2], 4
      %s490 = int_to_ptr.vmem [resolvable:$true] %s489
      %492 = dma.vmem_to_hbm [thread:$0]  %s490, 128, %s6, [#allocation3]
    $region29: #{tpu_custom_call.1} parent=1 // pred_fallthru
      _
    // Predicated region
    $region30: #{tpu_custom_call.1} parent=1 // pred_check
      _
    $region31: #{tpu_custom_call.1} parent=1 // pred_check_branch
      %494 = sbr.rel (0) target = $region33
    $region32: #{tpu_custom_call.1} parent=1 // pred_region
      %495 = dma.done [#allocation3], 128
    $region33: #{tpu_custom_call.1} parent=1 // pred_fallthru
      _
    %496 = vsyncpa [#allocation3], 1

// kernel: tpu_custom_call.1
$region0: #{tpu_custom_call.1}
  #allocation0 [shape = 'u32[]', space=smem, size = 0x4, offset = 0x4, fixed_abs, tag = 'smem constant byte address 0x4 - core index']
  #allocation1 [shape = 'u32[144,128]{1,0:T(1,128)}', space=vmem, size = 0x12000, scoped, tag = 'internal scratch']
  %s0 = inlined_call_operand.vmem [shape: f32[16,128], index: 0, kind: input, shape index: {}]
  %s1 = inlined_call_operand.vmem [shape: bf16[32,16], index: 1, kind: input, shape index: {}]
  %s2 = inlined_call_operand.vmem [shape: bf16[32,32], index: 2, kind: input, shape index: {}]
  %s3 = inlined_call_operand.vmem [shape: bf16[16,32], index: 3, kind: input, shape index: {}]
  %s4 = inlined_call_operand.vmem [shape: bf16[8,16], index: 4, kind: input, shape index: {}]
  %s5 = inlined_call_operand.vmem [shape: f32[32,4], index: 5, kind: input, shape index: {}]
  %s6 = inlined_call_operand.hbm [shape: f32[8,128], index: 6, kind: output, shape index: {}]
  %s7 = sld [smem:[#allocation0]]
  $region34: #{tpu_custom_call.1} parent=0
    _
  %s9 = ssub.s32 1, %s7
  %s10 = scalar_select 0, %s9, %s7
  $region1: #{tpu_custom_call.1} parent=0
    #allocation2 [shape = 'u8[4096]{0}', space=vmem, size = 0x1000, scoped, tag = 'output window, operand 0, single buffered']
    #allocation3 [shape = 's32[1]{0}', space=sflag, size = 0x4, scoped, tag = 'scoped memory for tpu_custom_call.1']
    %11 = vsyncpa [#allocation3], 0
    // Predicated region
    $region2: #{tpu_custom_call.1} parent=1 // pred_check
      _
    $region3: #{tpu_custom_call.1} parent=1 // pred_check_branch
      %13 = sbr.rel (0) target = $region5
    $region4: #{tpu_custom_call.1} parent=1 // pred_region
      _
    $region5: #{tpu_custom_call.1} parent=1 // pred_fallthru
      _
    // Predicated region
    $region6: #{tpu_custom_call.1} parent=1 // pred_check
      _
    $region7: #{tpu_custom_call.1} parent=1 // pred_check_branch
      %15 = sbr.rel (0) target = $region9
    $region8: #{tpu_custom_call.1} parent=1 // pred_region
      _
    $region9: #{tpu_custom_call.1} parent=1 // pred_fallthru
      _
    // Predicated region
    $region10: #{tpu_custom_call.1} parent=1 // pred_check
      _
    $region11: #{tpu_custom_call.1} parent=1 // pred_check_branch
      %17 = sbr.rel (0) target = $region13
    $region12: #{tpu_custom_call.1} parent=1 // pred_region
      _
    $region13: #{tpu_custom_call.1} parent=1 // pred_fallthru
      _
    // Predicated region
    $region14: #{tpu_custom_call.1} parent=1 // pred_check
      _
    $region15: #{tpu_custom_call.1} parent=1 // pred_check_branch
      %19 = sbr.rel (0) target = $region17
    $region16: #{tpu_custom_call.1} parent=1 // pred_region
      _
    $region17: #{tpu_custom_call.1} parent=1 // pred_fallthru
      _
    // Predicated region
    $region18: #{tpu_custom_call.1} parent=1 // pred_check
      _
    $region19: #{tpu_custom_call.1} parent=1 // pred_check_branch
      %21 = sbr.rel (0) target = $region21
    $region20: #{tpu_custom_call.1} parent=1 // pred_region
      _
    $region21: #{tpu_custom_call.1} parent=1 // pred_fallthru
      _
    // Predicated region
    $region22: #{tpu_custom_call.1} parent=1 // pred_check
      _
    $region23: #{tpu_custom_call.1} parent=1 // pred_check_branch
      %23 = sbr.rel (0) target = $region25
    $region24: #{tpu_custom_call.1} parent=1 // pred_region
      _
    $region25: #{tpu_custom_call.1} parent=1 // pred_fallthru
      _
    %v24 = vld [vmem:[%s0] sm:$0xff]
    %v25 = vld [vmem:[%s0 + $0x8] sm:$0xff]
    %v26 = vld [vmem:[%s1] sm:$0xf]
    %v27 = vld [vmem:[%s1 + $0x4] sm:$0xf]
    %v28 = vld [vmem:[%s1 + $0x8] sm:$0xf]
    %v29 = vld [vmem:[%s1 + $0xc] sm:$0xf]
    %v30 = vunpack.c.l.bf16 %v26
    %v31 = vunpack.c.l.bf16 %v27
    %v32 = vunpack.c.l.bf16 %v28
    %v33 = vunpack.c.l.bf16 %v29
    %v34 = vld [vmem:[%s5] sm:$0xff]
    %v35 = vld [vmem:[%s5 + $0x8] sm:$0xff]
    %v36 = vld [vmem:[%s5 + $0x10] sm:$0xff]
    %v37 = vld [vmem:[%s5 + $0x18] sm:$0xff]
    %39 = vset.pattern.permute.xlu0 0
    %40 = vperm.xlu0 %39, %v34
    %v41 = vpop.permute.xlu0 %40
    %44 = vset.pattern.permute.xlu0 0
    %45 = vperm.xlu0 %44, %v35
    %v46 = vpop.permute.xlu0 %45
    %49 = vset.pattern.permute.xlu0 0
    %50 = vperm.xlu0 %49, %v36
    %v51 = vpop.permute.xlu0 %50
    %54 = vset.pattern.permute.xlu0 0
    %55 = vperm.xlu0 %54, %v37
    %v56 = vpop.permute.xlu0 %55
    %vm58 = vcmask 130048
    %v60 = vsel %vm58, %v30, 0
    %v63 = vsel %vm58, %v31, 0
    %v66 = vsel %vm58, %v32, 0
    %v69 = vsel %vm58, %v33, 0
    %71 = vmatprep.subr.mxu0 0.0
    %72 = vmatpush1.msra.mxu0 %v24
    %73 = vmatprep.subr.mxu0 0.0
    %74 = vmatpush1.msra.mxu0 %v25
    %75 = vmatprep.subr.mxu0 0.0
    %76 = vmatpush1.msra.mxu0 0.0
    %77 = vmatprep.subr.mxu0 0.0
    %78 = vmatpush1.msra.mxu0 0.0
    %79 = vmatprep.subr.mxu0 0.0
    %80 = vmatpush1.msra.mxu0 0.0
    %81 = vmatprep.subr.mxu0 0.0
    %82 = vmatpush1.msra.mxu0 0.0
    %83 = vmatprep.subr.mxu0 0.0
    %84 = vmatpush1.msra.mxu0 0.0
    %85 = vmatprep.subr.mxu0 0.0
    %86 = vmatpush1.msra.mxu0 0.0
    %87 = vmatprep.subr.mxu0 0.0
    %88 = vmatpush1.msra.mxu0 0.0
    %89 = vmatprep.subr.mxu0 0.0
    %90 = vmatpush1.msra.mxu0 0.0
    %91 = vmatprep.subr.mxu0 0.0
    %92 = vmatpush1.msra.mxu0 0.0
    %93 = vmatprep.subr.mxu0 0.0
    %94 = vmatpush1.msra.mxu0 0.0
    %95 = vmatprep.subr.mxu0 0.0
    %96 = vmatpush1.msra.mxu0 0.0
    %97 = vmatprep.subr.mxu0 0.0
    %98 = vmatpush1.msra.mxu0 0.0
    %99 = vmatprep.subr.mxu0 0.0
    %100 = vmatpush1.msra.mxu0 0.0
    %101 = vmatprep.subr.mxu0 0.0
    %102 = vmatpush1.msra.mxu0 0.0
    %103 = vmatprep.subr.mxu0 0.0
    %104 = vmatpush1.msra.mxu0 0.0
    %105 = vmatprep.subr.mxu0 0.0
    %106 = vmatpush1.msra.mxu0 0.0
    %107 = vmatprep.subr.mxu0 0.0
    %108 = vmatpush1.msra.mxu0 0.0
    %109 = vmatprep.subr.mxu0 0.0
    %110 = vmatpush1.msra.mxu0 0.0
    %111 = vmatprep.subr.mxu0 0.0
    %112 = vmatpush1.msra.mxu0 0.0
    %113 = vmatprep.subr.mxu0 0.0
    %114 = vmatpush1.msra.mxu0 0.0
    %115 = vmatprep.subr.mxu0 0.0
    %116 = vmatpush1.msra.mxu0 0.0
    %117 = vmatprep.subr.mxu0 0.0
    %118 = vmatpush1.msra.mxu0 0.0
    %119 = vmatprep.subr.mxu0 0.0
    %120 = vmatpush1.msra.mxu0 0.0
    %121 = vmatprep.subr.mxu0 0.0
    %122 = vmatpush1.msra.mxu0 0.0
    %123 = vmatprep.subr.mxu0 0.0
    %124 = vmatpush1.msra.mxu0 0.0
    %125 = vmatprep.subr.mxu0 0.0
    %126 = vmatpush1.msra.mxu0 0.0
    %127 = vmatprep.subr.mxu0 0.0
    %128 = vmatpush1.msra.mxu0 0.0
    %129 = vmatprep.subr.mxu0 0.0
    %130 = vmatpush1.msra.mxu0 0.0
    %131 = vmatprep.subr.mxu0 0.0
    %132 = vmatpush1.msra.mxu0 0.0
    %133 = vmatprep.subr.mxu0 0.0
    %134 = vmatpush1.msra.mxu0 0.0
    %135 = vmatprep.mubr.f32.mxu0 0.0
    %136 = vmatmul.mubr.f32.gmra.mrb[0].mxu0 %v60
    %v137 = vpop.f32.mrb[0].mxu0
    %v138 = vadd.f32 %v41, %v137
    %v139 = vpop.f32.mrb[0].mxu0
    %140 = vmatprep.mubr.f32.mxu0 0.0
    %141 = vmatmul.mubr.f32.gmra.mrb[0].mxu0 %v63
    %v142 = vpop.f32.mrb[0].mxu0
    %v143 = vadd.f32 %v46, %v142
    %v144 = vpop.f32.mrb[0].mxu0
    %145 = vmatprep.mubr.f32.mxu0 0.0
    %146 = vmatmul.mubr.f32.gmra.mrb[0].mxu0 %v66
    %v147 = vpop.f32.mrb[0].mxu0
    %v148 = vadd.f32 %v51, %v147
    %v149 = vpop.f32.mrb[0].mxu0
    %150 = vmatprep.mubr.f32.mxu0 0.0
    %151 = vmatmul.mubr.f32.gmra.mrb[0].mxu0 %v69
    %v152 = vpop.f32.mrb[0].mxu0
    %v153 = vadd.f32 %v56, %v152
    %v154 = vpop.f32.mrb[0].mxu0
    %155 = vdwg.mxu0
    %v156 = vtanh.pop %v138
    %v157 = vtanh.pop %v143
    %v158 = vtanh.pop %v148
    %v159 = vtanh.pop %v153
    %v160 = vld [vmem:[%s2] sm:$0xf]
    %v161 = vld [vmem:[%s2 + $0x4] sm:$0xf]
    %v162 = vld [vmem:[%s2 + $0x8] sm:$0xf]
    %v163 = vld [vmem:[%s2 + $0xc] sm:$0xf]
    %v164 = vunpack.c.l.bf16 %v160
    %v165 = vunpack.c.l.bf16 %v161
    %v166 = vunpack.c.l.bf16 %v162
    %v167 = vunpack.c.l.bf16 %v163
    %168 = vset.pattern.permute.xlu0 1
    %169 = vperm.xlu0 %168, %v34
    %v170 = vpop.permute.xlu0 %169
    %172 = vset.pattern.permute.xlu0 1
    %173 = vperm.xlu0 %172, %v35
    %v174 = vpop.permute.xlu0 %173
    %176 = vset.pattern.permute.xlu0 1
    %177 = vperm.xlu0 %176, %v36
    %v178 = vpop.permute.xlu0 %177
    %180 = vset.pattern.permute.xlu0 1
    %181 = vperm.xlu0 %180, %v37
    %v182 = vpop.permute.xlu0 %181
    %vm184 = vcmask 261120
    %v186 = vsel %vm184, %v164, 0
    %v189 = vsel %vm184, %v165, 0
    %v192 = vsel %vm184, %v166, 0
    %v195 = vsel %vm184, %v167, 0
    %197 = vmatprep.subr.mxu0 0.0
    %198 = vmatpush1.msra.mxu0 %v156
    %199 = vmatprep.subr.mxu0 0.0
    %200 = vmatpush1.msra.mxu0 %v157
    %201 = vmatprep.subr.mxu0 0.0
    %202 = vmatpush1.msra.mxu0 %v158
    %203 = vmatprep.subr.mxu0 0.0
    %204 = vmatpush1.msra.mxu0 %v159
    %205 = vmatprep.subr.mxu0 0.0
    %206 = vmatpush1.msra.mxu0 0.0
    %207 = vmatprep.subr.mxu0 0.0
    %208 = vmatpush1.msra.mxu0 0.0
    %209 = vmatprep.subr.mxu0 0.0
    %210 = vmatpush1.msra.mxu0 0.0
    %211 = vmatprep.subr.mxu0 0.0
    %212 = vmatpush1.msra.mxu0 0.0
    %213 = vmatprep.subr.mxu0 0.0
    %214 = vmatpush1.msra.mxu0 0.0
    %215 = vmatprep.subr.mxu0 0.0
    %216 = vmatpush1.msra.mxu0 0.0
    %217 = vmatprep.subr.mxu0 0.0
    %218 = vmatpush1.msra.mxu0 0.0
    %219 = vmatprep.subr.mxu0 0.0
    %220 = vmatpush1.msra.mxu0 0.0
    %221 = vmatprep.subr.mxu0 0.0
    %222 = vmatpush1.msra.mxu0 0.0
    %223 = vmatprep.subr.mxu0 0.0
    %224 = vmatpush1.msra.mxu0 0.0
    %225 = vmatprep.subr.mxu0 0.0
    %226 = vmatpush1.msra.mxu0 0.0
    %227 = vmatprep.subr.mxu0 0.0
    %228 = vmatpush1.msra.mxu0 0.0
    %229 = vmatprep.subr.mxu0 0.0
    %230 = vmatpush1.msra.mxu0 0.0
    %231 = vmatprep.subr.mxu0 0.0
    %232 = vmatpush1.msra.mxu0 0.0
    %233 = vmatprep.subr.mxu0 0.0
    %234 = vmatpush1.msra.mxu0 0.0
    %235 = vmatprep.subr.mxu0 0.0
    %236 = vmatpush1.msra.mxu0 0.0
    %237 = vmatprep.subr.mxu0 0.0
    %238 = vmatpush1.msra.mxu0 0.0
    %239 = vmatprep.subr.mxu0 0.0
    %240 = vmatpush1.msra.mxu0 0.0
    %241 = vmatprep.subr.mxu0 0.0
    %242 = vmatpush1.msra.mxu0 0.0
    %243 = vmatprep.subr.mxu0 0.0
    %244 = vmatpush1.msra.mxu0 0.0
    %245 = vmatprep.subr.mxu0 0.0
    %246 = vmatpush1.msra.mxu0 0.0
    %247 = vmatprep.subr.mxu0 0.0
    %248 = vmatpush1.msra.mxu0 0.0
    %249 = vmatprep.subr.mxu0 0.0
    %250 = vmatpush1.msra.mxu0 0.0
    %251 = vmatprep.subr.mxu0 0.0
    %252 = vmatpush1.msra.mxu0 0.0
    %253 = vmatprep.subr.mxu0 0.0
    %254 = vmatpush1.msra.mxu0 0.0
    %255 = vmatprep.subr.mxu0 0.0
    %256 = vmatpush1.msra.mxu0 0.0
    %257 = vmatprep.subr.mxu0 0.0
    %258 = vmatpush1.msra.mxu0 0.0
    %259 = vmatprep.subr.mxu0 0.0
    %260 = vmatpush1.msra.mxu0 0.0
    %261 = vmatprep.mubr.f32.mxu0 0.0
    %262 = vmatmul.mubr.f32.gmra.mrb[0].mxu0 %v186
    %v263 = vpop.f32.mrb[0].mxu0
    %v264 = vadd.f32 %v170, %v263
    %v265 = vpop.f32.mrb[0].mxu0
    %266 = vmatprep.mubr.f32.mxu0 0.0
    %267 = vmatmul.mubr.f32.gmra.mrb[0].mxu0 %v189
    %v268 = vpop.f32.mrb[0].mxu0
    %v269 = vadd.f32 %v174, %v268
    %v270 = vpop.f32.mrb[0].mxu0
    %271 = vmatprep.mubr.f32.mxu0 0.0
    %272 = vmatmul.mubr.f32.gmra.mrb[0].mxu0 %v192
    %v273 = vpop.f32.mrb[0].mxu0
    %v274 = vadd.f32 %v178, %v273
    %v275 = vpop.f32.mrb[0].mxu0
    %276 = vmatprep.mubr.f32.mxu0 0.0
    %277 = vmatmul.mubr.f32.gmra.mrb[0].mxu0 %v195
    %v278 = vpop.f32.mrb[0].mxu0
    %v279 = vadd.f32 %v182, %v278
    %v280 = vpop.f32.mrb[0].mxu0
    %281 = vdwg.mxu0
    %v282 = vtanh.pop %v264
    %v283 = vtanh.pop %v269
    %v284 = vtanh.pop %v274
    %v285 = vtanh.pop %v279
    %v286 = vld [vmem:[%s3] sm:$0xf]
    %v287 = vld [vmem:[%s3 + $0x4] sm:$0xf]
    %v288 = vunpack.c.l.bf16 %v286
    %v289 = vunpack.c.l.bf16 %v287
    %v290 = vld [vmem:[%s5] sm:$0xff]
    %v291 = vld [vmem:[%s5 + $0x8] sm:$0xff]
    %293 = vset.pattern.permute.xlu0 2
    %294 = vperm.xlu0 %293, %v290
    %v295 = vpop.permute.xlu0 %294
    %298 = vset.pattern.permute.xlu0 2
    %299 = vperm.xlu0 %298, %v291
    %v300 = vpop.permute.xlu0 %299
    %v303 = vsel %vm184, %v288, 0
    %v306 = vsel %vm184, %v289, 0
    %308 = vmatprep.subr.mxu0 0.0
    %309 = vmatpush1.msra.mxu0 %v282
    %310 = vmatprep.subr.mxu0 0.0
    %311 = vmatpush1.msra.mxu0 %v283
    %312 = vmatprep.subr.mxu0 0.0
    %313 = vmatpush1.msra.mxu0 %v284
    %314 = vmatprep.subr.mxu0 0.0
    %315 = vmatpush1.msra.mxu0 %v285
    %316 = vmatprep.subr.mxu0 0.0
    %317 = vmatpush1.msra.mxu0 0.0
    %318 = vmatprep.subr.mxu0 0.0
    %319 = vmatpush1.msra.mxu0 0.0
    %320 = vmatprep.subr.mxu0 0.0
    %321 = vmatpush1.msra.mxu0 0.0
    %322 = vmatprep.subr.mxu0 0.0
    %323 = vmatpush1.msra.mxu0 0.0
    %324 = vmatprep.subr.mxu0 0.0
    %325 = vmatpush1.msra.mxu0 0.0
    %326 = vmatprep.subr.mxu0 0.0
    %327 = vmatpush1.msra.mxu0 0.0
    %328 = vmatprep.subr.mxu0 0.0
    %329 = vmatpush1.msra.mxu0 0.0
    %330 = vmatprep.subr.mxu0 0.0
    %331 = vmatpush1.msra.mxu0 0.0
    %332 = vmatprep.subr.mxu0 0.0
    %333 = vmatpush1.msra.mxu0 0.0
    %334 = vmatprep.subr.mxu0 0.0
    %335 = vmatpush1.msra.mxu0 0.0
    %336 = vmatprep.subr.mxu0 0.0
    %337 = vmatpush1.msra.mxu0 0.0
    %338 = vmatprep.subr.mxu0 0.0
    %339 = vmatpush1.msra.mxu0 0.0
    %340 = vmatprep.subr.mxu0 0.0
    %341 = vmatpush1.msra.mxu0 0.0
    %342 = vmatprep.subr.mxu0 0.0
    %343 = vmatpush1.msra.mxu0 0.0
    %344 = vmatprep.subr.mxu0 0.0
    %345 = vmatpush1.msra.mxu0 0.0
    %346 = vmatprep.subr.mxu0 0.0
    %347 = vmatpush1.msra.mxu0 0.0
    %348 = vmatprep.subr.mxu0 0.0
    %349 = vmatpush1.msra.mxu0 0.0
    %350 = vmatprep.subr.mxu0 0.0
    %351 = vmatpush1.msra.mxu0 0.0
    %352 = vmatprep.subr.mxu0 0.0
    %353 = vmatpush1.msra.mxu0 0.0
    %354 = vmatprep.subr.mxu0 0.0
    %355 = vmatpush1.msra.mxu0 0.0
    %356 = vmatprep.subr.mxu0 0.0
    %357 = vmatpush1.msra.mxu0 0.0
    %358 = vmatprep.subr.mxu0 0.0
    %359 = vmatpush1.msra.mxu0 0.0
    %360 = vmatprep.subr.mxu0 0.0
    %361 = vmatpush1.msra.mxu0 0.0
    %362 = vmatprep.subr.mxu0 0.0
    %363 = vmatpush1.msra.mxu0 0.0
    %364 = vmatprep.subr.mxu0 0.0
    %365 = vmatpush1.msra.mxu0 0.0
    %366 = vmatprep.subr.mxu0 0.0
    %367 = vmatpush1.msra.mxu0 0.0
    %368 = vmatprep.subr.mxu0 0.0
    %369 = vmatpush1.msra.mxu0 0.0
    %370 = vmatprep.subr.mxu0 0.0
    %371 = vmatpush1.msra.mxu0 0.0
    %372 = vmatprep.mubr.f32.mxu0 0.0
    %373 = vmatmul.mubr.f32.gmra.mrb[0].mxu0 %v303
    %v374 = vpop.f32.mrb[0].mxu0
    %v375 = vadd.f32 %v295, %v374
    %v376 = vpop.f32.mrb[0].mxu0
    %377 = vmatprep.mubr.f32.mxu0 0.0
    %378 = vmatmul.mubr.f32.gmra.mrb[0].mxu0 %v306
    %v379 = vpop.f32.mrb[0].mxu0
    %v380 = vadd.f32 %v300, %v379
    %v381 = vpop.f32.mrb[0].mxu0
    %382 = vdwg.mxu0
    %v383 = vtanh.pop %v375
    %v384 = vtanh.pop %v380
    %v385 = vld [vmem:[%s4] sm:$0xf]
    %v386 = vunpack.c.l.bf16 %v385
    %v387 = vld [vmem:[%s5] sm:$0xff]
    %389 = vset.pattern.permute.xlu0 3
    %390 = vperm.xlu0 %389, %v387
    %v391 = vpop.permute.xlu0 %390
    %v394 = vsel %vm58, %v386, 0
    %396 = vmatprep.subr.mxu0 0.0
    %397 = vmatpush1.msra.mxu0 %v383
    %398 = vmatprep.subr.mxu0 0.0
    %399 = vmatpush1.msra.mxu0 %v384
    %400 = vmatprep.subr.mxu0 0.0
    %401 = vmatpush1.msra.mxu0 0.0
    %402 = vmatprep.subr.mxu0 0.0
    %403 = vmatpush1.msra.mxu0 0.0
    %404 = vmatprep.subr.mxu0 0.0
    %405 = vmatpush1.msra.mxu0 0.0
    %406 = vmatprep.subr.mxu0 0.0
    %407 = vmatpush1.msra.mxu0 0.0
    %408 = vmatprep.subr.mxu0 0.0
    %409 = vmatpush1.msra.mxu0 0.0
    %410 = vmatprep.subr.mxu0 0.0
    %411 = vmatpush1.msra.mxu0 0.0
    %412 = vmatprep.subr.mxu0 0.0
    %413 = vmatpush1.msra.mxu0 0.0
    %414 = vmatprep.subr.mxu0 0.0
    %415 = vmatpush1.msra.mxu0 0.0
    %416 = vmatprep.subr.mxu0 0.0
    %417 = vmatpush1.msra.mxu0 0.0
    %418 = vmatprep.subr.mxu0 0.0
    %419 = vmatpush1.msra.mxu0 0.0
    %420 = vmatprep.subr.mxu0 0.0
    %421 = vmatpush1.msra.mxu0 0.0
    %422 = vmatprep.subr.mxu0 0.0
    %423 = vmatpush1.msra.mxu0 0.0
    %424 = vmatprep.subr.mxu0 0.0
    %425 = vmatpush1.msra.mxu0 0.0
    %426 = vmatprep.subr.mxu0 0.0
    %427 = vmatpush1.msra.mxu0 0.0
    %428 = vmatprep.subr.mxu0 0.0
    %429 = vmatpush1.msra.mxu0 0.0
    %430 = vmatprep.subr.mxu0 0.0
    %431 = vmatpush1.msra.mxu0 0.0
    %432 = vmatprep.subr.mxu0 0.0
    %433 = vmatpush1.msra.mxu0 0.0
    %434 = vmatprep.subr.mxu0 0.0
    %435 = vmatpush1.msra.mxu0 0.0
    %436 = vmatprep.subr.mxu0 0.0
    %437 = vmatpush1.msra.mxu0 0.0
    %438 = vmatprep.subr.mxu0 0.0
    %439 = vmatpush1.msra.mxu0 0.0
    %440 = vmatprep.subr.mxu0 0.0
    %441 = vmatpush1.msra.mxu0 0.0
    %442 = vmatprep.subr.mxu0 0.0
    %443 = vmatpush1.msra.mxu0 0.0
    %444 = vmatprep.subr.mxu0 0.0
    %445 = vmatpush1.msra.mxu0 0.0
    %446 = vmatprep.subr.mxu0 0.0
    %447 = vmatpush1.msra.mxu0 0.0
    %448 = vmatprep.subr.mxu0 0.0
    %449 = vmatpush1.msra.mxu0 0.0
    %450 = vmatprep.subr.mxu0 0.0
    %451 = vmatpush1.msra.mxu0 0.0
    %452 = vmatprep.subr.mxu0 0.0
    %453 = vmatpush1.msra.mxu0 0.0
    %454 = vmatprep.subr.mxu0 0.0
    %455 = vmatpush1.msra.mxu0 0.0
    %456 = vmatprep.subr.mxu0 0.0
    %457 = vmatpush1.msra.mxu0 0.0
    %458 = vmatprep.subr.mxu0 0.0
    %459 = vmatpush1.msra.mxu0 0.0
    %460 = vmatprep.mubr.f32.mxu0 0.0
    %461 = vmatmul.mubr.f32.gmra.mrb[0].mxu0 %v394
    %v462 = vpop.f32.mrb[0].mxu0
    %v463 = vadd.f32 %v391, %v462
    %v464 = vpop.f32.mrb[0].mxu0
    %465 = vdwg.mxu0
    %v466 = vmax.f32 %v463, 0.0
    %v467 = vand.u32 2147483647, %v463
    %v468 = vsub.f32 0.0, %v467
    %v469 = vmul.f32 %v468, 1.442695
    %v470 = vpow.pop %v469
    %v471 = vadd.f32 %v470, 1.0
    %v472 = vlog2.pop %v471
    %v473 = vmul.f32 %v472, 0.6931472
    %v474 = vmul.f32 -0.5, %v470
    %v475 = vadd.f32 %v474, 1.0
    %v476 = vmul.f32 %v475, %v470
    %v477 = vand.u32 2147483647, %v470
    %vm478 = vcmp.lt.f32.partialorder %v477, 0.0004427343
    %v479 = vsel %vm478, %v476, %v473
    %v480 = vadd.f32 %v466, %v479
    %v481 = vadd.f32 %v480, 1.0
    %482 = vst [vmem:[#allocation2] sm:$0xff] %v481
    // Predicated region
    $region26: #{tpu_custom_call.1} parent=1 // pred_check
      _
    $region27: #{tpu_custom_call.1} parent=1 // pred_check_branch
      %484 = sbr.rel (0) target = $region29
    $region28: #{tpu_custom_call.1} parent=1 // pred_region
      %s486 = ssub.s32 128, 128
      %487 = vsyncadd [#allocation3], %s486
      %s489 = sshll.u32 [#allocation2], 4
      %s490 = int_to_ptr.vmem [resolvable:$true] %s489
      %492 = dma.vmem_to_hbm [thread:$0]  %s490, 128, %s6, [#allocation3]
    $region29: #{tpu_custom_call.1} parent=1 // pred_fallthru
      _
    // Predicated region
    $region30: #{tpu_custom_call.1} parent=1 // pred_check
      _
    $region31: #{tpu_custom_call.1} parent=1 // pred_check_branch
      %494 = sbr.rel (0) target = $region33
    $region32: #{tpu_custom_call.1} parent=1 // pred_region
      %495 = dma.done [#allocation3], 128
    $region33: #{tpu_custom_call.1} parent=1 // pred_fallthru
      _
    %496 = vsyncpa [#allocation3], 1

</llo_original>
